<compile_context>
chip_gen: v6e
topology: v6e:2x2x1
jax: 0.10.0
libtpu: 0.0.40
codegen_flags: <defaults>
</compile_context>

<pallas_src>
import functools

import jax
import jax.numpy as jnp
from jax import lax
from jax.experimental import pallas as pl
from jax.experimental.pallas import tpu as pltpu


# Raised above the default scoped VMEM (16 MiB v5e / 32 MiB v6e,v7x) but kept
# below v7x's 64 MiB physical VMEM.
_VMEM_LIMIT = 48 * 1024 * 1024


# ---------------------------------------------------------------------------
# helpers
# ---------------------------------------------------------------------------
def _pick_tile(n, target, align, *, max_fallback_elems=1 << 22):
    """Largest multiple-of-`align` tile <= target that divides n.

    Falls back to the full dimension (always a legal block size), but guarded
    so a prime-ish huge dimension cannot silently blow VMEM."""
    if n <= target:
        return n
    t = (target // align) * align
    while t >= align:
        if n % t == 0:
            return t
        t -= align
    if n > max_fallback_elems:
        raise ValueError(
            f"_pick_tile: no tile <= {target} (align {align}) divides {n}; "
            "pad the input to a tileable size.")
    return n


# ---------------------------------------------------------------------------
# K-tiled linear:  y = x @ W + b   (f32 accumulation in VMEM scratch)
# ---------------------------------------------------------------------------
def _linear_kernel(x_ref, w_ref, b_ref, o_ref, acc_ref):
    kk = pl.program_id(2)

    @pl.when(kk == 0)
    def _init():
        acc_ref[...] = jnp.zeros_like(acc_ref)

    acc_ref[...] += jnp.dot(x_ref[...], w_ref[...],
                            preferred_element_type=jnp.float32)

    @pl.when(kk == pl.num_programs(2) - 1)
    def _finalize():
        o_ref[...] = (acc_ref[...] + b_ref[...]).astype(o_ref.dtype)


def _linear(x2d, w, b, *, out_dtype):
    M, K = x2d.shape
    _, N = w.shape
    itemsize = x2d.dtype.itemsize
    align_m = 16 if itemsize == 2 else 8          # bf16 sublane packing
    tm = _pick_tile(M, 512, align_m)              # larger row tile: less weight restream
    tn = _pick_tile(N, 512, 128)                  # lane-dense output blocks
    tk = _pick_tile(K, 512, 128)                  # K-tiling decouples tiles from E
    grid = (M // tm, N // tn, K // tk)            # reduction axis last

    cost = pl.CostEstimate(
        flops=2 * M * N * K,
        transcendentals=0,
        bytes_accessed=(M * K + K * N + N) * itemsize
                       + M * N * jnp.dtype(out_dtype).itemsize,
    )

    return pl.pallas_call(
        _linear_kernel,
        out_shape=jax.ShapeDtypeStruct((M, N), out_dtype),
        grid=grid,
        in_specs=[
            pl.BlockSpec((tm, tk), lambda i, j, k: (i, k)),   # activations
            pl.BlockSpec((tk, tn), lambda i, j, k: (k, j)),   # weight
            pl.BlockSpec((1, tn), lambda i, j, k: (0, j)),    # bias (f32)
        ],
        out_specs=pl.BlockSpec((tm, tn), lambda i, j, k: (i, j)),
        scratch_shapes=[pltpu.VMEM((tm, tn), jnp.float32)],
        compiler_params=pltpu.CompilerParams(
            dimension_semantics=("parallel", "parallel", "arbitrary"),
            vmem_limit_bytes=_VMEM_LIMIT,
        ),
        cost_estimate=cost,
    )(x2d, w, b)


# ---------------------------------------------------------------------------
# flash attention kernel body (shared by both spec layouts)
#   q_ref: (tq, Hd)   k_ref/v_ref: (S, Hd) resident   o_ref: (tq, Hd)
# ---------------------------------------------------------------------------
def _flash_kernel(q_ref, k_ref, v_ref, o_ref, m_sc, l_sc, acc_sc, *, tk, exact):
    ki = pl.program_id(3)

    @pl.when(ki == 0)
    def _init():
        m_sc[...] = jnp.full(m_sc.shape, -jnp.inf, jnp.float32)
        l_sc[...] = jnp.zeros(l_sc.shape, jnp.float32)
        acc_sc[...] = jnp.zeros(acc_sc.shape, jnp.float32)

    # kv chunk sliced out of the VMEM-resident K/V block (fetched once per head)
    start = pl.multiple_of(ki * tk, tk)
    k_blk = k_ref[pl.ds(start, tk), :]
    v_blk = v_ref[pl.ds(start, tk), :]

    # Q @ K^T without materializing a transpose (contract head_dim of both).
    # 1/sqrt(head_dim) scale is pre-folded into the Q projection weights.
    s = lax.dot_general(
        q_ref[...], k_blk,
        dimension_numbers=(((1,), (1,)), ((), ())),
        preferred_element_type=jnp.float32)                  # (tq, tk) f32

    m_prev = m_sc[...]
    m_new = jnp.maximum(m_prev, jnp.max(s, axis=-1, keepdims=True))
    alpha = jnp.exp(m_prev - m_new)
    p = jnp.exp(s - m_new)                                    # f32 softmax math
    l_sc[...] = alpha * l_sc[...] + jnp.sum(p, axis=-1, keepdims=True)
    acc_sc[...] = alpha * acc_sc[...] + jnp.dot(
        p.astype(v_blk.dtype), v_blk, preferred_element_type=jnp.float32)
    m_sc[...] = m_new

    @pl.when(ki == pl.num_programs(3) - 1)
    def _finalize():
        if exact:
            o_ref[...] = (acc_sc[...] / l_sc[...]).astype(o_ref.dtype)
        else:
            inv_l = pl.reciprocal(l_sc[...], approx=True)     # EUP slot
            o_ref[...] = (acc_sc[...] * inv_l).astype(o_ref.dtype)


def _flash_scratch(tq, hd):
    return [
        pltpu.VMEM((tq, 1), jnp.float32),   # running max m
        pltpu.VMEM((tq, 1), jnp.float32),   # running denom l
        pltpu.VMEM((tq, hd), jnp.float32),  # f32 output accumulator
    ]


def _flash_cost(B, H, S, Hd, itemsize):
    # Q, K, V each read once (K/V resident per head), output written once.
    return pl.CostEstimate(
        flops=4 * B * H * S * S * Hd,
        transcendentals=B * H * S * S,
        bytes_accessed=4 * B * H * S * Hd * itemsize,
    )


# ---------------------------------------------------------------------------
# flash attention, head-major fallback path: q/k/v are (B, H, S, Hd)
# ---------------------------------------------------------------------------
def _flash_attention_heads(q, k, v, *, exact):
    B, H, S, Hd = q.shape
    align = 16 if q.dtype.itemsize == 2 else 8
    tq = _pick_tile(S, 512, align)
    tk = _pick_tile(S, 256, align)
    grid = (B, H, S // tq, S // tk)
    kernel = functools.partial(_flash_kernel, tk=tk, exact=exact)

    return pl.pallas_call(
        kernel,
        out_shape=jax.ShapeDtypeStruct((B, H, S, Hd), q.dtype),
        grid=grid,
        in_specs=[
            pl.BlockSpec((None, None, tq, Hd), lambda b, h, qi, ki: (b, h, qi, 0)),
            # K/V resident: block index depends only on (b, h) -> fetched once
            pl.BlockSpec((None, None, S, Hd), lambda b, h, qi, ki: (b, h, 0, 0)),
            pl.BlockSpec((None, None, S, Hd), lambda b, h, qi, ki: (b, h, 0, 0)),
        ],
        out_specs=pl.BlockSpec((None, None, tq, Hd),
                               lambda b, h, qi, ki: (b, h, qi, 0)),
        scratch_shapes=_flash_scratch(tq, Hd),
        compiler_params=pltpu.CompilerParams(
            dimension_semantics=("parallel", "parallel", "parallel", "arbitrary"),
            vmem_limit_bytes=_VMEM_LIMIT,
        ),
        cost_estimate=_flash_cost(B, H, S, Hd, q.dtype.itemsize),
    )(q, k, v)


# ---------------------------------------------------------------------------
# flash attention, fused head-slicing path (Hd % 128 == 0):
#   reads Q/K/V blocks straight out of the (B*S, 3E) QKV buffer and writes
#   attention output directly into a (B*S, E) slab (no XLA transposes).
# ---------------------------------------------------------------------------
def _flash_attention_fused(qkv, *, B, S, H, Hd, exact):
    E = H * Hd
    align = 16 if qkv.dtype.itemsize == 2 else 8
    tq = _pick_tile(S, 512, align)
    tk = _pick_tile(S, 256, align)
    n_q = S // tq
    grid = (B, H, n_q, S // tk)
    kernel = functools.partial(_flash_kernel, tk=tk, exact=exact)

    return pl.pallas_call(
        kernel,
        out_shape=jax.ShapeDtypeStruct((B * S, E), qkv.dtype),
        grid=grid,
        in_specs=[
            # Q head h, rows of batch b / q-tile qi
            pl.BlockSpec((tq, Hd), lambda b, h, qi, ki: (b * n_q + qi, h)),
            # K head h, full sequence of batch b (resident across qi, ki)
            pl.BlockSpec((S, Hd), lambda b, h, qi, ki: (b, H + h)),
            # V head h, full sequence of batch b (resident across qi, ki)
            pl.BlockSpec((S, Hd), lambda b, h, qi, ki: (b, 2 * H + h)),
        ],
        out_specs=pl.BlockSpec((tq, Hd), lambda b, h, qi, ki: (b * n_q + qi, h)),
        scratch_shapes=_flash_scratch(tq, Hd),
        compiler_params=pltpu.CompilerParams(
            dimension_semantics=("parallel", "parallel", "parallel", "arbitrary"),
            vmem_limit_bytes=_VMEM_LIMIT,
        ),
        cost_estimate=_flash_cost(B, H, S, Hd, qkv.dtype.itemsize),
    )(qkv, qkv, qkv)


# ---------------------------------------------------------------------------
# full forward pass
# ---------------------------------------------------------------------------
def multi_head_self_attention(x, params, *, num_heads, compute_dtype=jnp.bfloat16):
    """x: (bs, seq_len, emb_dim) f32. params: dict of (in,out) weights + (1,emb) biases."""
    bs, seq_len, emb_dim = x.shape
    assert emb_dim % num_heads == 0
    head_dim = emb_dim // num_heads
    scale = 1.0 / (float(head_dim) ** 0.5)
    exact = jnp.dtype(compute_dtype) == jnp.dtype(jnp.float32)

    # Pack Q/K/V into one (E, 3E) weight; fold the softmax scale into Wq/bq.
    w_qkv = jnp.concatenate(
        [params["wq"] * scale, params["wk"], params["wv"]], axis=1
    ).astype(compute_dtype)
    b_qkv = jnp.concatenate(
        [params["bq"] * scale, params["bk"], params["bv"]], axis=1
    ).astype(jnp.float32)
    w_o = params["wo"].astype(compute_dtype)
    b_o = params["bo"].astype(jnp.float32)

    x2d = x.astype(compute_dtype).reshape(bs * seq_len, emb_dim)

    # 1) fused QKV projection
    qkv = _linear(x2d, w_qkv, b_qkv, out_dtype=compute_dtype)         # (B*S, 3E)

    # 2) flash attention (K/V resident per head, online softmax, f32 accum)
    if head_dim % 128 == 0:
        # lane constraint satisfied: slice heads in-place, no XLA transposes
        attn2d = _flash_attention_fused(
            qkv, B=bs, S=seq_len, H=num_heads, Hd=head_dim, exact=exact)
    else:
        # fallback: cheap XLA reshape/transpose plumbing outside the kernel
        qkv5 = qkv.reshape(bs, seq_len, 3, num_heads, head_dim)
        qkv5 = jnp.transpose(qkv5, (2, 0, 3, 1, 4))                   # (3,B,H,S,Hd)
        attn = _flash_attention_heads(qkv5[0], qkv5[1], qkv5[2], exact=exact)
        attn2d = jnp.transpose(attn, (0, 2, 1, 3)).reshape(bs * seq_len, emb_dim)

    # 3) output projection (final result in the input dtype)
    out = _linear(attn2d, w_o, b_o, out_dtype=x.dtype)                # (B*S, E)
    return out.reshape(bs, seq_len, emb_dim)


# ---------------------------------------------------------------------------
# pure-JAX reference (PyTorch 'unchanged' branch, eval mode)
# ---------------------------------------------------------------------------
def _reference(x, params, num_heads):
    bs, s, e = x.shape
    hd = e // num_heads
    q = x @ params["wq"] + params["bq"][0]
    k = x @ params["wk"] + params["bk"][0]
    v = x @ params["wv"] + params["bv"][0]

    def split(t):
        return t.reshape(bs, s, num_heads, hd).transpose(0, 2, 1, 3)  # (bs,H,S,Hd)

    q, k, v = split(q), split(k), split(v)
    scores = jnp.einsum("bhqd,bhkd->bhqk", q, k) / (hd ** 0.5)
    w = jax.nn.softmax(scores, axis=-1)
    o = jnp.einsum("bhqk,bhkd->bhqd", w, v)
    o = o.transpose(0, 2, 1, 3).reshape(bs, s, e)
    return o @ params["wo"] + params["bo"][0]


def _make_params(key, emb_dim):
    ks = jax.random.split(key, 8)
    wscale = emb_dim ** -0.5

    def init_w(k):
        # stored as (in, out) = W.T relative to nn.Linear's (out, in)
        return wscale * jax.random.normal(k, (emb_dim, emb_dim), dtype=jnp.float32)

    def init_b(k):
        return 0.1 * jax.random.normal(k, (1, emb_dim), dtype=jnp.float32)

    return {
        "wq": init_w(ks[0]), "bq": init_b(ks[1]),
        "wk": init_w(ks[2]), "bk": init_b(ks[3]),
        "wv": init_w(ks[4]), "bv": init_b(ks[5]),
        "wo": init_w(ks[6]), "bo": init_b(ks[7]),
    }


def _check_config(key, bs, seq_len, emb_dim, num_heads, tag):
    kx, kp = jax.random.split(key)
    x = jax.random.normal(kx, (bs, seq_len, emb_dim), dtype=jnp.float32)
    params = _make_params(kp, emb_dim)

    out_f32 = multi_head_self_attention(
        x, params, num_heads=num_heads, compute_dtype=jnp.float32)
    out_bf16 = multi_head_self_attention(
        x, params, num_heads=num_heads, compute_dtype=jnp.bfloat16)
    jax.block_until_ready((out_f32, out_bf16))

    ref = _reference(x, params, num_heads)
    assert out_f32.shape == (bs, seq_len, emb_dim)
    assert out_bf16.shape == (bs, seq_len, emb_dim)
    assert jnp.allclose(out_f32, ref, atol=3e-3, rtol=3e-3), f"{tag}: f32 mismatch"
    assert jnp.allclose(out_bf16, ref, atol=5e-2, rtol=5e-2), f"{tag}: bf16 mismatch"


if __name__ == "__main__":
    key = jax.random.PRNGKey(0)
    k_a, k_b = jax.random.split(key)

    # small config: head_dim=8 -> transpose fallback path
    _check_config(k_a, bs=2, seq_len=8, emb_dim=32, num_heads=4, tag="small")

    # head_dim=128 -> fused head-slicing path (no XLA transposes)
    _check_config(k_b, bs=2, seq_len=16, emb_dim=256, num_heads=2, tag="fused")

    print("KERNEL_OK")
</pallas_src>

<mosaic_0001>
module attributes {stable_mosaic.version = 11 : i64} {
  func.func @_linear_kernel(%arg0: i32, %arg1: i32, %arg2: i32, %arg3: memref<16x32xf32, #tpu.memory_space<vmem>>, %arg4: memref<32x96xf32, #tpu.memory_space<vmem>>, %arg5: memref<1x96xf32, #tpu.memory_space<vmem>>, %arg6: memref<16x96xf32, #tpu.memory_space<vmem>>, %arg7: memref<16x96xf32, #tpu.memory_space<vmem>>) attributes {dimension_semantics = [#tpu.dimension_semantics<parallel>, #tpu.dimension_semantics<parallel>, #tpu.dimension_semantics<arbitrary>], iteration_bounds = array<i64: 1, 1, 1>, scalar_prefetch = 0 : i64, scratch_operands = 1 : i64, tpu.core_type = #tpu.core_type<tc>, window_params = [{transform_indices = @transform_0, window_bounds = array<i64: 16, 32>}, {transform_indices = @transform_1, window_bounds = array<i64: 32, 96>}, {transform_indices = @transform_2, window_bounds = array<i64: 1, 96>}, {transform_indices = @transform_3, window_bounds = array<i64: 16, 96>}]} {
    %c0_i32 = arith.constant 0 : i32
    %0 = arith.cmpi eq, %arg2, %c0_i32 : i32
    %1 = arith.extui %0 : i1 to i32
    %c0_i32_0 = arith.constant 0 : i32
    %2 = arith.cmpi ne, %1, %c0_i32_0 : i32
    scf.if %2 {
      %cst_10 = arith.constant 0.000000e+00 : f32
      %12 = vector.broadcast %cst_10 : f32 to vector<16x96xf32>
      %c0_11 = arith.constant 0 : index
      %c0_12 = arith.constant 0 : index
      %13 = vector.load %arg7[%c0_11, %c0_12] : memref<16x96xf32, #tpu.memory_space<vmem>>, vector<16x96xf32>
      tpu.vector_store %arg7[%c0_11, %c0_12], %12 {strides = array<i32>} : memref<16x96xf32, #tpu.memory_space<vmem>>, vector<16x96xf32>,
    } else {
    }
    %c0 = arith.constant 0 : index
    %c0_1 = arith.constant 0 : index
    %3 = vector.load %arg7[%c0, %c0_1] : memref<16x96xf32, #tpu.memory_space<vmem>>, vector<16x96xf32>
    %c0_2 = arith.constant 0 : index
    %c0_3 = arith.constant 0 : index
    %4 = vector.load %arg3[%c0_2, %c0_3] : memref<16x32xf32, #tpu.memory_space<vmem>>, vector<16x32xf32>
    %c0_4 = arith.constant 0 : index
    %c0_5 = arith.constant 0 : index
    %5 = vector.load %arg4[%c0_4, %c0_5] : memref<32x96xf32, #tpu.memory_space<vmem>>, vector<32x96xf32>
    %cst = arith.constant dense<0.000000e+00> : vector<16x96xf32>
    %6 = tpu.matmul %4, %5, %cst {dimension_numbers = #tpu.dot_dimension_numbers<[1], [0], [0], [1], [0, 0, 1, 1], [], []>} : vector<16x32xf32>, vector<32x96xf32>, vector<16x96xf32> -> vector<16x96xf32>
    %7 = arith.addf %3, %6 : vector<16x96xf32>
    %c0_6 = arith.constant 0 : index
    %c0_7 = arith.constant 0 : index
    %8 = vector.load %arg7[%c0_6, %c0_7] : memref<16x96xf32, #tpu.memory_space<vmem>>, vector<16x96xf32>
    tpu.vector_store %arg7[%c0_6, %c0_7], %7 {strides = array<i32>} : memref<16x96xf32, #tpu.memory_space<vmem>>, vector<16x96xf32>,
    %c0_i32_8 = arith.constant 0 : i32
    %9 = arith.cmpi eq, %arg2, %c0_i32_8 : i32
    %10 = arith.extui %9 : i1 to i32
    %c0_i32_9 = arith.constant 0 : i32
    %11 = arith.cmpi ne, %10, %c0_i32_9 : i32
    scf.if %11 {
      %c0_10 = arith.constant 0 : index
      %c0_11 = arith.constant 0 : index
      %12 = vector.load %arg7[%c0_10, %c0_11] : memref<16x96xf32, #tpu.memory_space<vmem>>, vector<16x96xf32>
      %c0_12 = arith.constant 0 : index
      %c0_13 = arith.constant 0 : index
      %13 = vector.load %arg5[%c0_12, %c0_13] : memref<1x96xf32, #tpu.memory_space<vmem>>, vector<1x96xf32>
      %14 = vector.broadcast %13 : vector<1x96xf32> to vector<16x96xf32>
      %15 = arith.addf %12, %14 : vector<16x96xf32>
      %c0_14 = arith.constant 0 : index
      %c0_15 = arith.constant 0 : index
      %16 = vector.load %arg6[%c0_14, %c0_15] : memref<16x96xf32, #tpu.memory_space<vmem>>, vector<16x96xf32>
      tpu.vector_store %arg6[%c0_14, %c0_15], %15 {strides = array<i32>} : memref<16x96xf32, #tpu.memory_space<vmem>>, vector<16x96xf32>,
    } else {
    }
    return
  }
  func.func @transform_0(%arg0: i32, %arg1: i32, %arg2: i32) -> (i32, i32) {
    %c0_i32 = arith.constant 0 : i32
    return %arg0, %arg2 : i32, i32
  }
  func.func @transform_1(%arg0: i32, %arg1: i32, %arg2: i32) -> (i32, i32) {
    %c0_i32 = arith.constant 0 : i32
    return %arg2, %arg1 : i32, i32
  }
  func.func @transform_2(%arg0: i32, %arg1: i32, %arg2: i32) -> (i32, i32) {
    %c0_i32 = arith.constant 0 : i32
    %c0_i32_0 = arith.constant 0 : i32
    return %c0_i32, %arg1 : i32, i32
  }
  func.func @transform_3(%arg0: i32, %arg1: i32, %arg2: i32) -> (i32, i32) {
    %c0_i32 = arith.constant 0 : i32
    return %arg0, %arg1 : i32, i32
  }
}

</mosaic_0001>

<llo_original>
// kernel: tpu_custom_call.1
$region0: #{tpu_custom_call.1}
  #allocation0 [shape = 'u32[]', space=smem, size = 0x4, offset = 0x4, fixed_abs, tag = 'smem constant byte address 0x4 - core index']
  #allocation1 [shape = 'u32[144,128]{1,0:T(1,128)}', space=vmem, size = 0x12000, scoped, tag = 'internal scratch']
  #allocation2 [shape = 'f32[16,96]{1,0:T(8,128)}', space=vmem, size = 0x2000, scoped, tag = 'scratch operand']
  %s0 = inlined_call_operand.hbm [shape: f32[16,32], index: 0, kind: input, shape index: {}]
  %s1 = inlined_call_operand.hbm [shape: f32[32,96], index: 1, kind: input, shape index: {}]
  %s2 = inlined_call_operand.vmem [shape: f32[1,96], index: 2, kind: input, shape index: {}]
  %s3 = inlined_call_operand.hbm [shape: f32[16,96], index: 3, kind: output, shape index: {}]
  %s4 = sld [smem:[#allocation0]]
  $region38: #{tpu_custom_call.1} parent=0
    _
  %s6 = ssub.s32 1, %s4
  %s7 = scalar_select 0, %s6, %s4
  $region1: #{tpu_custom_call.1} parent=0
    #allocation3 [shape = 'u8[8192]{0}', space=vmem, size = 0x2000, scoped, tag = 'input window, operand 0, single buffered']
    #allocation4 [shape = 's32[1]{0}', space=sflag, size = 0x4, scoped, tag = 'scoped memory for tpu_custom_call.1']
    #allocation5 [shape = 's32[1]{0}', space=sflag, size = 0x4, scoped, tag = 'scoped memory for tpu_custom_call.1']
    #allocation6 [shape = 'u8[16384]{0}', space=vmem, size = 0x4000, scoped, tag = 'input window, operand 1, single buffered']
    #allocation7 [shape = 's32[1]{0}', space=sflag, size = 0x4, scoped, tag = 'scoped memory for tpu_custom_call.1']
    #allocation8 [shape = 'u8[8192]{0}', space=vmem, size = 0x2000, scoped, tag = 'output window, operand 0, single buffered']
    %8 = vsyncpa [#allocation4], 0
    %9 = vsyncpa [#allocation7], 0
    %10 = vsyncpa [#allocation5], 0
    // Predicated region
    $region2: #{tpu_custom_call.1} parent=1 // pred_check
      _
    $region3: #{tpu_custom_call.1} parent=1 // pred_check_branch
      %12 = sbr.rel (0) target = $region5
    $region4: #{tpu_custom_call.1} parent=1 // pred_region
      %s14 = ssub.s32 256, 256
      %15 = vsyncadd [#allocation4], %s14
      %s16 = sshll.u32 [#allocation3], 4
      %s17 = int_to_ptr.vmem [resolvable:$true] %s16
      %22 = dma.hbm_to_vmem [thread:$0]  %s0, 256, %s17, [#allocation4], 128, 128, 8
    $region5: #{tpu_custom_call.1} parent=1 // pred_fallthru
      _
    // Predicated region
    $region6: #{tpu_custom_call.1} parent=1 // pred_check
      _
    $region7: #{tpu_custom_call.1} parent=1 // pred_check_branch
      %24 = sbr.rel (0) target = $region9
    $region8: #{tpu_custom_call.1} parent=1 // pred_region
      %s26 = ssub.s32 512, 512
      %27 = vsyncadd [#allocation7], %s26
      %s28 = sshll.u32 [#allocation6], 4
      %s29 = int_to_ptr.vmem [resolvable:$true] %s28
      %34 = dma.hbm_to_vmem [thread:$0]  %s1, 512, %s29, [#allocation7], 128, 128, 8
    $region9: #{tpu_custom_call.1} parent=1 // pred_fallthru
      _
    // Predicated region
    $region10: #{tpu_custom_call.1} parent=1 // pred_check
      _
    $region11: #{tpu_custom_call.1} parent=1 // pred_check_branch
      %36 = sbr.rel (0) target = $region13
    $region12: #{tpu_custom_call.1} parent=1 // pred_region
      _
    $region13: #{tpu_custom_call.1} parent=1 // pred_fallthru
      _
    // Predicated region
    $region14: #{tpu_custom_call.1} parent=1 // pred_check
      _
    $region15: #{tpu_custom_call.1} parent=1 // pred_check_branch
      %38 = sbr.rel (0) target = $region17
    $region16: #{tpu_custom_call.1} parent=1 // pred_region
      %39 = dma.done [#allocation4], 256
    $region17: #{tpu_custom_call.1} parent=1 // pred_fallthru
      _
    // Predicated region
    $region18: #{tpu_custom_call.1} parent=1 // pred_check
      _
    $region19: #{tpu_custom_call.1} parent=1 // pred_check_branch
      %41 = sbr.rel (0) target = $region21
    $region20: #{tpu_custom_call.1} parent=1 // pred_region
      %42 = dma.done [#allocation7], 512
    $region21: #{tpu_custom_call.1} parent=1 // pred_fallthru
      _
    %p43 = scmp.eq.s32.totalorder 0, 0
    // Predicated region
    $region22: #{tpu_custom_call.1} parent=1 // pred_check
      %p44 = pneg %p43
    $region23: #{tpu_custom_call.1} parent=1 // pred_check_branch
      %46 = sbr.rel (%p44) target = $region25
    $region24: #{tpu_custom_call.1} parent=1 // pred_region
      %vm47 = vcmask 785408
      %48 = vst.msk [vmem:[#allocation2] sm:$0xff] %vm47, 0.0
      %49 = vst.msk [vmem:[#allocation2 + $0x8] sm:$0xff] %vm47, 0.0
    $region25: #{tpu_custom_call.1} parent=1 // pred_fallthru
      _
    %v50 = vld [vmem:[#allocation2] sm:$0xff]
    %v51 = vld [vmem:[#allocation2 + $0x8] sm:$0xff]
    %v52 = vld [vmem:[#allocation3] sm:$0xff]
    %v53 = vld [vmem:[#allocation3 + $0x8] sm:$0xff]
    %v54 = vld [vmem:[#allocation6] sm:$0xff]
    %v55 = vld [vmem:[#allocation6 + $0x8] sm:$0xff]
    %v56 = vld [vmem:[#allocation6 + $0x10] sm:$0xff]
    %v57 = vld [vmem:[#allocation6 + $0x18] sm:$0xff]
    %vm58 = vcmask 261120
    %v60 = vsel %vm58, %v52, 0
    %v63 = vsel %vm58, %v53, 0
    %65 = vmatprep.subr.mxu0 0.0
    %66 = vmatpush1.msra.mxu0 0.0
    %67 = vmatprep.subr.mxu0 0.0
    %68 = vmatpush1.msra.mxu0 0.0
    %69 = vmatprep.subr.mxu0 0.0
    %70 = vmatpush1.msra.mxu0 0.0
    %71 = vmatprep.subr.mxu0 0.0
    %72 = vmatpush1.msra.mxu0 0.0
    %73 = vmatprep.subr.mxu0 0.0
    %74 = vmatpush1.msra.mxu0 0.0
    %75 = vmatprep.subr.mxu0 0.0
    %76 = vmatpush1.msra.mxu0 0.0
    %77 = vmatprep.subr.mxu0 0.0
    %78 = vmatpush1.msra.mxu0 0.0
    %79 = vmatprep.subr.mxu0 0.0
    %80 = vmatpush1.msra.mxu0 0.0
    %81 = vmatprep.subr.mxu0 0.0
    %82 = vmatpush1.msra.mxu0 0.0
    %83 = vmatprep.subr.mxu0 0.0
    %84 = vmatpush1.msra.mxu0 0.0
    %85 = vmatprep.subr.mxu0 0.0
    %86 = vmatpush1.msra.mxu0 0.0
    %87 = vmatprep.subr.mxu0 0.0
    %88 = vmatpush1.msra.mxu0 0.0
    %89 = vmatprep.subr.mxu0 0.0
    %90 = vmatpush1.msra.mxu0 %v57
    %91 = vmatprep.subr.mxu0 0.0
    %92 = vmatpush1.msra.mxu0 %v56
    %93 = vmatprep.subr.mxu0 0.0
    %94 = vmatpush1.msra.mxu0 %v55
    %95 = vmatprep.subr.mxu0 0.0
    %96 = vmatpush1.msra.mxu0 %v54
    %97 = vmatprep.subr.mxu0 0.0
    %98 = vmatpush2.msra.mxu0 0.0
    %99 = vmatprep.subr.mxu0 0.0
    %100 = vmatpush2.msra.mxu0 0.0
    %101 = vmatprep.subr.mxu0 0.0
    %102 = vmatpush2.msra.mxu0 0.0
    %103 = vmatprep.subr.mxu0 0.0
    %104 = vmatpush2.msra.mxu0 0.0
    %105 = vmatprep.subr.mxu0 0.0
    %106 = vmatpush2.msra.mxu0 0.0
    %107 = vmatprep.subr.mxu0 0.0
    %108 = vmatpush2.msra.mxu0 0.0
    %109 = vmatprep.subr.mxu0 0.0
    %110 = vmatpush2.msra.mxu0 0.0
    %111 = vmatprep.subr.mxu0 0.0
    %112 = vmatpush2.msra.mxu0 0.0
    %113 = vmatprep.subr.mxu0 0.0
    %114 = vmatpush2.msra.mxu0 0.0
    %115 = vmatprep.subr.mxu0 0.0
    %116 = vmatpush2.msra.mxu0 0.0
    %117 = vmatprep.subr.mxu0 0.0
    %118 = vmatpush2.msra.mxu0 0.0
    %119 = vmatprep.subr.mxu0 0.0
    %120 = vmatpush2.msra.mxu0 0.0
    %121 = vmatprep.subr.mxu0 0.0
    %122 = vmatpush2.msra.mxu0 0.0
    %123 = vmatprep.subr.mxu0 0.0
    %124 = vmatpush2.msra.mxu0 0.0
    %125 = vmatprep.subr.mxu0 0.0
    %126 = vmatpush2.msra.mxu0 0.0
    %127 = vmatprep.subr.mxu0 0.0
    %128 = vmatpush2.msra.mxu0 0.0
    %129 = vmatprep.mubr.f32.mxu0 0.0
    %130 = vmatmul.mubr.f32.gmra.mxu0 %v60
    %v131 = vpop.f32.mrf.mxu0
    %v132 = vadd.f32 0.0, %v131
    %v133 = vpop.f32.mrf.mxu0
    %134 = vmatprep.mubr.f32.mxu0 0.0
    %135 = vmatmul.mubr.f32.gmra.mxu0 %v63
    %v136 = vpop.f32.mrf.mxu0
    %v137 = vadd.f32 0.0, %v136
    %v138 = vpop.f32.mrf.mxu0
    %139 = vdwg.mxu0
    %v140 = vadd.f32 %v50, %v132
    %v141 = vadd.f32 %v51, %v137
    %vm142 = vcmask 785408
    %143 = vst.msk [vmem:[#allocation2] sm:$0xff] %vm142, %v140
    %144 = vst.msk [vmem:[#allocation2 + $0x8] sm:$0xff] %vm142, %v141
    // Predicated region
    $region26: #{tpu_custom_call.1} parent=1 // pred_check
      %p145 = pneg %p43
    $region27: #{tpu_custom_call.1} parent=1 // pred_check_branch
      %147 = sbr.rel (%p145) target = $region29
    $region28: #{tpu_custom_call.1} parent=1 // pred_region
      %v148 = vld [vmem:[#allocation2] sm:$0xff]
      %v149 = vld [vmem:[#allocation2 + $0x8] sm:$0xff]
      %v150 = vld [vmem:[%s2] sm:$0x1]
      %v152 = vlaneseq
      %v153 = vshrl.u32 %v152, 7
      %v154 = vsub.s32 0, %v153
      %v155 = vrot.slane %v150, %v154
      %v157 = vadd.f32 %v148, %v155
      %v158 = vadd.f32 %v149, %v155
      %159 = vst.msk [vmem:[#allocation8] sm:$0xff] %vm142, %v157
      %160 = vst.msk [vmem:[#allocation8 + $0x8] sm:$0xff] %vm142, %v158
    $region29: #{tpu_custom_call.1} parent=1 // pred_fallthru
      _
    // Predicated region
    $region30: #{tpu_custom_call.1} parent=1 // pred_check
      _
    $region31: #{tpu_custom_call.1} parent=1 // pred_check_branch
      %162 = sbr.rel (0) target = $region33
    $region32: #{tpu_custom_call.1} parent=1 // pred_region
      %s164 = ssub.s32 256, 256
      %165 = vsyncadd [#allocation5], %s164
      %s166 = sshll.u32 [#allocation8], 4
      %s167 = int_to_ptr.vmem [resolvable:$true] %s166
      %172 = dma.vmem_to_hbm [thread:$0]  %s167, 256, %s3, [#allocation5], 128, 128, 8
    $region33: #{tpu_custom_call.1} parent=1 // pred_fallthru
      _
    // Predicated region
    $region34: #{tpu_custom_call.1} parent=1 // pred_check
      _
    $region35: #{tpu_custom_call.1} parent=1 // pred_check_branch
      %174 = sbr.rel (0) target = $region37
    $region36: #{tpu_custom_call.1} parent=1 // pred_region
      %175 = dma.done [#allocation5], 256
    $region37: #{tpu_custom_call.1} parent=1 // pred_fallthru
      _
    %176 = vsyncpa [#allocation4], 1
    %177 = vsyncpa [#allocation7], 1
    %178 = vsyncpa [#allocation5], 1

</llo_original>
